<compile_context>
chip_gen: v6e
topology: v6e:2x2x1
jax: 0.10.0
libtpu: 0.0.40
codegen_flags: <defaults>
</compile_context>

<pallas_src>
import functools

import jax
import jax.numpy as jnp
from jax.experimental import pallas as pl
from jax.experimental.pallas import tpu as pltpu


def _round_up(n, m):
    return ((n + m - 1) // m) * m


def _sigmoid(x):
    # EUP tanh path: same value as 1/(1+exp(-x)) but avoids a VALU divide.
    return 0.5 * (jnp.tanh(0.5 * x) + 1.0)


def _num_tensorcores():
    """2 TensorCores per chip on v7x, 1 on v5e/v6e."""
    try:
        kind = jax.devices()[0].device_kind.lower()
    except Exception:
        return 1
    return 2 if "v7" in kind else 1


def _pick_batch_tile(B, n_tc):
    """Batch tile size.

    Single-TC chips (v5e/v6e): one block — every extra grid step is ~600
    cycles of pipeline overhead that dwarfs the per-tile compute here.
    Dual-TC (v7x): even-length 'parallel' grid so both TensorCores get work.
    """
    max_tb = 4096
    if n_tc >= 2:
        for parts in (2, 4, 8, 16, 32):
            if B % parts == 0:
                tb = B // parts
                if tb % 128 == 0 and tb <= max_tb:
                    return tb
        # TODO(synk): cdiv+pad B to a multiple of 256 here so odd batches
        # still shard across both TensorCores instead of using one block.
    if B <= max_tb:
        return B
    for tb in (4096, 2048, 1024, 512, 256, 128):
        if B % tb == 0:
            return tb
    return B


def pack_policy_params(w1, b1, w2, b2):
    """Pack all parameters into one f32 buffer.  Call ONCE per param update.

    w1: [F, H], b1: [1, H] (or [H]), w2: [H, A], b2: [1, A] (or [A]).

    Layout ([rows, C], C = max(F, H)); every section starts on an 8-row
    (sublane) boundary so all in-kernel slices are zero-cost ref views:
      rows [0,  H)      : w1^T           [H, F]
      rows [R1, R1 + H) : b1 as a column [H, 1]
      rows [R2, R2 + A) : w2^T           [A, H]
      rows [R3, R3 + A) : b2 as a column [A, 1]
    Returns (params, meta) with meta = (F, H, A, R1, R2, R3).
    """
    F, H = w1.shape
    A = w2.shape[1]
    C = max(F, H)
    R1 = _round_up(H, 8)
    R2 = R1 + _round_up(H, 8)
    R3 = R2 + _round_up(A, 8)
    R = R3 + _round_up(A, 8)

    buf = jnp.zeros((R, C), jnp.float32)
    buf = buf.at[0:H, 0:F].set(w1.T.astype(jnp.float32))
    buf = buf.at[R1:R1 + H, 0:1].set(jnp.reshape(b1, (H, 1)).astype(jnp.float32))
    buf = buf.at[R2:R2 + A, 0:H].set(w2.T.astype(jnp.float32))
    buf = buf.at[R3:R3 + A, 0:1].set(jnp.reshape(b2, (A, 1)).astype(jnp.float32))
    return buf, (F, H, A, R1, R2, R3)


def _policy_kernel_general(x_ref, p_ref, o_ref, *, F, H, A, R1, R2, R3):
    """Generic n_actions path, transposed layout: out = softmax over rows."""
    xT = x_ref[...]                                    # [F, TB]  batch on lanes
    w1T = p_ref[0:H, 0:F]                              # [H, F]
    b1 = p_ref[R1:R1 + H, 0:1]                         # [H, 1]
    hT = _sigmoid(jnp.dot(w1T, xT, preferred_element_type=jnp.float32) + b1)  # [H, TB]

    w2T = p_ref[R2:R2 + A, 0:H]                        # [A, H]
    b2 = p_ref[R3:R3 + A, 0:1]                         # [A, 1]
    logits = jnp.dot(w2T, hT, preferred_element_type=jnp.float32) + b2         # [A, TB]

    # Numerically stable softmax across the (tiny) action/sublane axis;
    # exact divide so probabilities sum to 1.
    m = jnp.max(logits, axis=0, keepdims=True)         # [1, TB]
    e = jnp.exp(logits - m)
    denom = jnp.sum(e, axis=0, keepdims=True)
    o_ref[...] = (e / denom).astype(o_ref.dtype)


def _policy_kernel_binary(x_ref, p_ref, o_ref, *, F, H, R1, R2, R3):
    """n_actions == 2 fast path: p0 = sigmoid(z0 - z1); only p0 is emitted."""
    xT = x_ref[...]                                    # [F, TB]
    w1T = p_ref[0:H, 0:F]                              # [H, F]
    b1 = p_ref[R1:R1 + H, 0:1]                         # [H, 1]
    hT = _sigmoid(jnp.dot(w1T, xT, preferred_element_type=jnp.float32) + b1)  # [H, TB]

    w2d = p_ref[R2:R2 + 1, 0:H] - p_ref[R2 + 1:R2 + 2, 0:H]   # [1, H] = w2[:,0]-w2[:,1]
    b2d = p_ref[R3:R3 + 1, 0:1] - p_ref[R3 + 1:R3 + 2, 0:1]   # [1, 1]
    d = jnp.dot(w2d, hT, preferred_element_type=jnp.float32) + b2d             # [1, TB]
    o_ref[...] = _sigmoid(d).astype(o_ref.dtype)       # lane-dense [1, TB] store


def policy_net_forward(x, params, meta):
    """x: [B, F]; params/meta from pack_policy_params -> probs [B, n_actions]."""
    F, H, A, R1, R2, R3 = meta
    B, Fx = x.shape
    assert Fx == F, (Fx, F)

    n_tc = _num_tensorcores()
    tb = _pick_batch_tile(B, n_tc)
    grid = (B // tb,)

    xT = x.T.astype(jnp.float32)                       # [F, B]: batch -> lane axis

    binary = (A == 2)
    a_out = 1 if binary else A
    if binary:
        kernel = functools.partial(_policy_kernel_binary,
                                   F=F, H=H, R1=R1, R2=R2, R3=R3)
    else:
        kernel = functools.partial(_policy_kernel_general,
                                   F=F, H=H, A=A, R1=R1, R2=R2, R3=R3)

    cost = pl.CostEstimate(
        flops=2 * B * (F * H + H * (1 if binary else A)),
        transcendentals=B * (H + (1 if binary else A)),
        bytes_accessed=4 * (B * F + int(params.size) + B * a_out),
    )

    outT = pl.pallas_call(
        kernel,
        out_shape=jax.ShapeDtypeStruct((a_out, B), jnp.float32),
        grid_spec=pltpu.PrefetchScalarGridSpec(
            num_scalar_prefetch=0,
            grid=grid,
            in_specs=[
                pl.BlockSpec((F, tb), lambda i: (0, i)),       # batch tile of x^T
                pl.BlockSpec(params.shape, lambda i: (0, 0)),  # params stay resident
            ],
            out_specs=pl.BlockSpec((a_out, tb), lambda i: (0, i)),
        ),
        compiler_params=pltpu.CompilerParams(
            dimension_semantics=("parallel",),   # shards batch across TCs on v7x
        ),
        cost_estimate=cost,
    )(xT, params)

    if binary:
        p0 = outT[0]                                   # [B]
        return jnp.stack([p0, 1.0 - p0], axis=-1)      # [B, 2]
    return outT.T                                      # [B, A]


def _torch_linear_init(key, fan_in, fan_out):
    """torch.nn.Linear default init (uniform +-1/sqrt(fan_in)), W pre-transposed."""
    kw, kb = jax.random.split(key)
    bound = 1.0 / jnp.sqrt(jnp.float32(fan_in))
    w = jax.random.uniform(kw, (fan_in, fan_out), jnp.float32, -bound, bound)
    b = jax.random.uniform(kb, (1, fan_out), jnp.float32, -bound, bound)
    return w, b


def _reference(x, w1, b1, w2, b2):
    h = jax.nn.sigmoid(x @ w1 + b1)
    return jax.nn.softmax(h @ w2 + b2, axis=-1)


if __name__ == "__main__":
    key = jax.random.PRNGKey(0)
    kx, k1, k2, kx3, k13, k23 = jax.random.split(key, 6)

    # --- CartPole sizes (n_actions = 2 fast path), batch lane-dense.
    n_features, n_actions, hidden, batch = 4, 2, 20, 256
    x = jax.random.normal(kx, (batch, n_features), jnp.float32)
    w1, b1 = _torch_linear_init(k1, n_features, hidden)
    w2, b2 = _torch_linear_init(k2, hidden, n_actions)

    params, meta = pack_policy_params(w1, b1, w2, b2)   # pack ONCE, outside hot loop
    out = jax.block_until_ready(policy_net_forward(x, params, meta))
    ref = _reference(x, w1, b1, w2, b2)
    assert out.shape == (batch, n_actions)
    assert jnp.allclose(out, ref, atol=1e-4, rtol=1e-4), \
        float(jnp.max(jnp.abs(out - ref)))

    # --- Generic n_actions path (A != 2); exact softmax divide -> tight tol.
    n_actions3, batch3 = 3, 128
    x3 = jax.random.normal(kx3, (batch3, n_features), jnp.float32)
    w13, b13 = _torch_linear_init(k13, n_features, hidden)
    w23, b23 = _torch_linear_init(k23, hidden, n_actions3)

    params3, meta3 = pack_policy_params(w13, b13, w23, b23)
    out3 = jax.block_until_ready(policy_net_forward(x3, params3, meta3))
    ref3 = _reference(x3, w13, b13, w23, b23)
    assert out3.shape == (batch3, n_actions3)
    assert jnp.allclose(out3, ref3, atol=1e-4, rtol=1e-4), \
        float(jnp.max(jnp.abs(out3 - ref3)))

    print("KERNEL_OK")
</pallas_src>

<mosaic_0001>
module attributes {stable_mosaic.version = 11 : i64} {
  func.func @_policy_kernel_binary(%arg0: i32, %arg1: memref<4x256xf32, #tpu.memory_space<vmem>>, %arg2: memref<64x20xf32, #tpu.memory_space<vmem>>, %arg3: memref<1x256xf32, #tpu.memory_space<vmem>>) attributes {dimension_semantics = [#tpu.dimension_semantics<parallel>], iteration_bounds = array<i64: 1>, scalar_prefetch = 0 : i64, scratch_operands = 0 : i64, tpu.core_type = #tpu.core_type<tc>, window_params = [{transform_indices = @transform_0, window_bounds = array<i64: 4, 256>}, {pipeline_mode = #tpu.pipeline_mode<synchronous>, transform_indices = @transform_1, window_bounds = array<i64: 64, 20>}, {transform_indices = @transform_2, window_bounds = array<i64: 1, 256>}]} {
    %c0 = arith.constant 0 : index
    %c0_0 = arith.constant 0 : index
    %0 = vector.load %arg1[%c0, %c0_0] : memref<4x256xf32, #tpu.memory_space<vmem>>, vector<4x256xf32>
    %c0_1 = arith.constant 0 : index
    %c0_2 = arith.constant 0 : index
    %1 = vector.load %arg2[%c0_1, %c0_2] : memref<64x20xf32, #tpu.memory_space<vmem>>, vector<20x4xf32>
    %c24 = arith.constant 24 : index
    %c0_3 = arith.constant 0 : index
    %2 = vector.load %arg2[%c24, %c0_3] : memref<64x20xf32, #tpu.memory_space<vmem>>, vector<20x1xf32>
    %cst = arith.constant dense<0.000000e+00> : vector<20x256xf32>
    %3 = tpu.matmul %1, %0, %cst {dimension_numbers = #tpu.dot_dimension_numbers<[1], [0], [0], [1], [0, 0, 1, 1], [], []>} : vector<20x4xf32>, vector<4x256xf32>, vector<20x256xf32> -> vector<20x256xf32>
    %4 = vector.broadcast %2 : vector<20x1xf32> to vector<20x256xf32>
    %5 = arith.addf %3, %4 : vector<20x256xf32>
    %cst_4 = arith.constant 5.000000e-01 : f32
    %6 = vector.broadcast %cst_4 : f32 to vector<20x256xf32>
    %7 = arith.mulf %6, %5 : vector<20x256xf32>
    %8 = math.tanh %7 : vector<20x256xf32>
    %cst_5 = arith.constant 1.000000e+00 : f32
    %9 = vector.broadcast %cst_5 : f32 to vector<20x256xf32>
    %10 = arith.addf %8, %9 : vector<20x256xf32>
    %cst_6 = arith.constant 5.000000e-01 : f32
    %11 = vector.broadcast %cst_6 : f32 to vector<20x256xf32>
    %12 = arith.mulf %11, %10 : vector<20x256xf32>
    %c48 = arith.constant 48 : index
    %c0_7 = arith.constant 0 : index
    %13 = vector.load %arg2[%c48, %c0_7] : memref<64x20xf32, #tpu.memory_space<vmem>>, vector<1x20xf32>
    %c49 = arith.constant 49 : index
    %c0_8 = arith.constant 0 : index
    %14 = vector.load %arg2[%c49, %c0_8] : memref<64x20xf32, #tpu.memory_space<vmem>>, vector<1x20xf32>
    %15 = arith.subf %13, %14 : vector<1x20xf32>
    %c56 = arith.constant 56 : index
    %c0_9 = arith.constant 0 : index
    %16 = vector.load %arg2[%c56, %c0_9] : memref<64x20xf32, #tpu.memory_space<vmem>>, vector<1x1xf32>
    %c57 = arith.constant 57 : index
    %c0_10 = arith.constant 0 : index
    %17 = vector.load %arg2[%c57, %c0_10] : memref<64x20xf32, #tpu.memory_space<vmem>>, vector<1x1xf32>
    %18 = arith.subf %16, %17 : vector<1x1xf32>
    %cst_11 = arith.constant dense<0.000000e+00> : vector<1x256xf32>
    %19 = tpu.matmul %15, %12, %cst_11 {dimension_numbers = #tpu.dot_dimension_numbers<[1], [0], [0], [1], [0, 0, 1, 1], [], []>} : vector<1x20xf32>, vector<20x256xf32>, vector<1x256xf32> -> vector<1x256xf32>
    %20 = vector.broadcast %18 : vector<1x1xf32> to vector<1x256xf32>
    %21 = arith.addf %19, %20 : vector<1x256xf32>
    %cst_12 = arith.constant 5.000000e-01 : f32
    %22 = vector.broadcast %cst_12 : f32 to vector<1x256xf32>
    %23 = arith.mulf %22, %21 : vector<1x256xf32>
    %24 = math.tanh %23 : vector<1x256xf32>
    %cst_13 = arith.constant 1.000000e+00 : f32
    %25 = vector.broadcast %cst_13 : f32 to vector<1x256xf32>
    %26 = arith.addf %24, %25 : vector<1x256xf32>
    %cst_14 = arith.constant 5.000000e-01 : f32
    %27 = vector.broadcast %cst_14 : f32 to vector<1x256xf32>
    %28 = arith.mulf %27, %26 : vector<1x256xf32>
    %c0_15 = arith.constant 0 : index
    %c0_16 = arith.constant 0 : index
    %29 = vector.load %arg3[%c0_15, %c0_16] : memref<1x256xf32, #tpu.memory_space<vmem>>, vector<1x256xf32>
    tpu.vector_store %arg3[%c0_15, %c0_16], %28 {strides = array<i32>} : memref<1x256xf32, #tpu.memory_space<vmem>>, vector<1x256xf32>,
    return
  }
  func.func @transform_0(%arg0: i32) -> (i32, i32) {
    %c0_i32 = arith.constant 0 : i32
    %c0_i32_0 = arith.constant 0 : i32
    return %c0_i32, %arg0 : i32, i32
  }
  func.func @transform_1(%arg0: i32) -> (i32, i32) {
    %c0_i32 = arith.constant 0 : i32
    %c0_i32_0 = arith.constant 0 : i32
    %c0_i32_1 = arith.constant 0 : i32
    return %c0_i32, %c0_i32_0 : i32, i32
  }
  func.func @transform_2(%arg0: i32) -> (i32, i32) {
    %c0_i32 = arith.constant 0 : i32
    %c0_i32_0 = arith.constant 0 : i32
    return %c0_i32, %arg0 : i32, i32
  }
}

</mosaic_0001>

<llo_original>
// kernel: tpu_custom_call.1
$region0: #{tpu_custom_call.1}
  #allocation0 [shape = 'u32[]', space=smem, size = 0x4, offset = 0x4, fixed_abs, tag = 'smem constant byte address 0x4 - core index']
  #allocation1 [shape = 'u32[144,128]{1,0:T(1,128)}', space=vmem, size = 0x12000, scoped, tag = 'internal scratch']
  %s0 = inlined_call_operand.vmem [shape: f32[4,256], index: 0, kind: input, shape index: {}]
  %s1 = inlined_call_operand.vmem [shape: f32[64,20], index: 1, kind: input, shape index: {}]
  %s2 = inlined_call_operand.hbm [shape: f32[1,256], index: 2, kind: output, shape index: {}]
  %s3 = sld [smem:[#allocation0]]
  $region18: #{tpu_custom_call.1} parent=0
    _
  %s5 = ssub.s32 1, %s3
  %s6 = scalar_select 0, %s5, %s3
  $region1: #{tpu_custom_call.1} parent=0
    #allocation2 [shape = 'u8[1024]{0}', space=vmem, size = 0x400, scoped, tag = 'output window, operand 0, single buffered']
    #allocation3 [shape = 's32[1]{0}', space=sflag, size = 0x4, scoped, tag = 'scoped memory for tpu_custom_call.1']
    %7 = vsyncpa [#allocation3], 0
    // Predicated region
    $region2: #{tpu_custom_call.1} parent=1 // pred_check
      _
    $region3: #{tpu_custom_call.1} parent=1 // pred_check_branch
      %9 = sbr.rel (0) target = $region5
    $region4: #{tpu_custom_call.1} parent=1 // pred_region
      _
    $region5: #{tpu_custom_call.1} parent=1 // pred_fallthru
      _
    // Predicated region
    $region6: #{tpu_custom_call.1} parent=1 // pred_check
      _
    $region7: #{tpu_custom_call.1} parent=1 // pred_check_branch
      %11 = sbr.rel (0) target = $region9
    $region8: #{tpu_custom_call.1} parent=1 // pred_region
      _
    $region9: #{tpu_custom_call.1} parent=1 // pred_fallthru
      _
    %v12 = vld [vmem:[%s0] sm:$0xff]
    %v13 = vld [vmem:[%s1] sm:$0xff]
    %v14 = vld [vmem:[%s1 + $0x8] sm:$0xff]
    %v15 = vld [vmem:[%s1 + $0x10] sm:$0xf]
    %v16 = vld [vmem:[%s1 + $0x18] sm:$0xff]
    %v17 = vld [vmem:[%s1 + $0x20] sm:$0xff]
    %v18 = vld [vmem:[%s1 + $0x28] sm:$0xf]
    %20 = vset.pattern.permute.xlu0 0
    %21 = vperm.xlu0 %20, %v16
    %v22 = vpop.permute.xlu0 %21
    %25 = vset.pattern.permute.xlu0 0
    %26 = vperm.xlu0 %25, %v17
    %v27 = vpop.permute.xlu0 %26
    %30 = vset.pattern.permute.xlu0 0
    %31 = vperm.xlu0 %30, %v18
    %v32 = vpop.permute.xlu0 %31
    %v35 = vcombine.high %v12, %v12
    %vm36 = vcmask 31744
    %v38 = vsel %vm36, %v13, 0
    %v41 = vsel %vm36, %v14, 0
    %v44 = vsel %vm36, %v15, 0
    %vm46 = vcmask 1043456
    %v47 = vsel %vm46, %v12, 0
    %v49 = vsel %vm46, %v35, 0
    %51 = vmatprep.subr.mxu0 0.0
    %52 = vmatpush1.msra.mxu0 0.0
    %53 = vmatprep.subr.mxu0 0.0
    %54 = vmatpush1.msra.mxu0 0.0
    %55 = vmatprep.subr.mxu0 0.0
    %56 = vmatpush1.msra.mxu0 0.0
    %57 = vmatprep.subr.mxu0 0.0
    %58 = vmatpush1.msra.mxu0 0.0
    %59 = vmatprep.subr.mxu0 0.0
    %60 = vmatpush1.msra.mxu0 0.0
    %61 = vmatprep.subr.mxu0 0.0
    %62 = vmatpush1.msra.mxu0 0.0
    %63 = vmatprep.subr.mxu0 0.0
    %64 = vmatpush1.msra.mxu0 0.0
    %65 = vmatprep.subr.mxu0 0.0
    %66 = vmatpush1.msra.mxu0 0.0
    %67 = vmatprep.subr.mxu0 0.0
    %68 = vmatpush1.msra.mxu0 0.0
    %69 = vmatprep.subr.mxu0 0.0
    %70 = vmatpush1.msra.mxu0 0.0
    %71 = vmatprep.subr.mxu0 0.0
    %72 = vmatpush1.msra.mxu0 0.0
    %73 = vmatprep.subr.mxu0 0.0
    %74 = vmatpush1.msra.mxu0 0.0
    %75 = vmatprep.subr.mxu0 0.0
    %76 = vmatpush1.msra.mxu0 0.0
    %77 = vmatprep.subr.mxu0 0.0
    %78 = vmatpush1.msra.mxu0 0.0
    %79 = vmatprep.subr.mxu0 0.0
    %80 = vmatpush1.msra.mxu0 0.0
    %81 = vmatprep.subr.mxu0 %v49
    %82 = vmatpush1.msra.mxu0 %v47
    %83 = vmatprep.subr.mxu0 0.0
    %84 = vmatpush2.msra.mxu0 0.0
    %85 = vmatprep.subr.mxu0 0.0
    %86 = vmatpush2.msra.mxu0 0.0
    %87 = vmatprep.subr.mxu0 0.0
    %88 = vmatpush2.msra.mxu0 0.0
    %89 = vmatprep.subr.mxu0 0.0
    %90 = vmatpush2.msra.mxu0 0.0
    %91 = vmatprep.subr.mxu0 0.0
    %92 = vmatpush2.msra.mxu0 0.0
    %93 = vmatprep.subr.mxu0 0.0
    %94 = vmatpush2.msra.mxu0 0.0
    %95 = vmatprep.subr.mxu0 0.0
    %96 = vmatpush2.msra.mxu0 0.0
    %97 = vmatprep.subr.mxu0 0.0
    %98 = vmatpush2.msra.mxu0 0.0
    %99 = vmatprep.subr.mxu0 0.0
    %100 = vmatpush2.msra.mxu0 0.0
    %101 = vmatprep.subr.mxu0 0.0
    %102 = vmatpush2.msra.mxu0 0.0
    %103 = vmatprep.subr.mxu0 0.0
    %104 = vmatpush2.msra.mxu0 0.0
    %105 = vmatprep.subr.mxu0 0.0
    %106 = vmatpush2.msra.mxu0 0.0
    %107 = vmatprep.subr.mxu0 0.0
    %108 = vmatpush2.msra.mxu0 0.0
    %109 = vmatprep.subr.mxu0 0.0
    %110 = vmatpush2.msra.mxu0 0.0
    %111 = vmatprep.subr.mxu0 0.0
    %112 = vmatpush2.msra.mxu0 0.0
    %113 = vmatprep.subr.mxu0 0.0
    %114 = vmatpush2.msra.mxu0 0.0
    %115 = vmatprep.mubr.f32.mxu0 0.0
    %116 = vmatmul.mubr.f32.gmra.mxu0 %v38
    %v117 = vpop.f32.mrf.mxu0
    %v118 = vadd.f32 %v22, %v117
    %v119 = vpop.f32.mrf.mxu0
    %v120 = vadd.f32 %v22, %v119
    %121 = vmatprep.mubr.f32.mxu0 0.0
    %122 = vmatmul.mubr.f32.gmra.mxu0 %v41
    %v123 = vpop.f32.mrf.mxu0
    %v124 = vadd.f32 %v27, %v123
    %v125 = vpop.f32.mrf.mxu0
    %v126 = vadd.f32 %v27, %v125
    %127 = vmatprep.mubr.f32.mxu0 0.0
    %128 = vmatmul.mubr.f32.gmra.mxu0 %v44
    %v129 = vpop.f32.mrf.mxu0
    %v130 = vadd.f32 %v32, %v129
    %v131 = vpop.f32.mrf.mxu0
    %v132 = vadd.f32 %v32, %v131
    %133 = vdwg.mxu0
    %v134 = vmul.f32 %v118, 0.5
    %v135 = vmul.f32 %v120, 0.5
    %v136 = vmul.f32 %v124, 0.5
    %v137 = vmul.f32 %v126, 0.5
    %v138 = vmul.f32 %v130, 0.5
    %v139 = vmul.f32 %v132, 0.5
    %v140 = vtanh.pop %v134
    %v141 = vtanh.pop %v135
    %v142 = vtanh.pop %v136
    %v143 = vtanh.pop %v137
    %v144 = vtanh.pop %v138
    %v145 = vtanh.pop %v139
    %v146 = vadd.f32 %v140, 1.0
    %v147 = vadd.f32 %v141, 1.0
    %v148 = vadd.f32 %v142, 1.0
    %v149 = vadd.f32 %v143, 1.0
    %v150 = vadd.f32 %v144, 1.0
    %v151 = vadd.f32 %v145, 1.0
    %v152 = vmul.f32 %v146, 0.5
    %v153 = vmul.f32 %v147, 0.5
    %v154 = vmul.f32 %v148, 0.5
    %v155 = vmul.f32 %v149, 0.5
    %v156 = vmul.f32 %v150, 0.5
    %v157 = vmul.f32 %v151, 0.5
    %v158 = vld [vmem:[%s1 + $0x30] sm:$0x1]
    %v159 = vld [vmem:[%s1 + $0x31] sm:$0x1]
    %v160 = vsub.f32 %v158, %v159
    %v161 = vld [vmem:[%s1 + $0x38] sm:$0x1]
    %v162 = vld [vmem:[%s1 + $0x39] sm:$0x1]
    %v163 = vsub.f32 %v161, %v162
    %165 = vset.pattern.permute.xlu0 0
    %166 = vperm.xlu0 %165, %v163
    %v167 = vpop.permute.xlu0 %166
    %vm169 = vcmask 162816
    %v171 = vsel %vm169, %v160, 0
    %v174 = vsel %vm46, %v156, 0
    %v177 = vsel %vm46, %v157, 0
    %179 = vmatprep.subr.mxu0 0.0
    %180 = vmatpush1.msra.mxu0 0.0
    %181 = vmatprep.subr.mxu0 0.0
    %182 = vmatpush1.msra.mxu0 0.0
    %183 = vmatprep.subr.mxu0 0.0
    %184 = vmatpush1.msra.mxu0 0.0
    %185 = vmatprep.subr.mxu0 0.0
    %186 = vmatpush1.msra.mxu0 0.0
    %187 = vmatprep.subr.mxu0 0.0
    %188 = vmatpush1.msra.mxu0 0.0
    %189 = vmatprep.subr.mxu0 0.0
    %190 = vmatpush1.msra.mxu0 0.0
    %191 = vmatprep.subr.mxu0 0.0
    %192 = vmatpush1.msra.mxu0 0.0
    %193 = vmatprep.subr.mxu0 0.0
    %194 = vmatpush1.msra.mxu0 0.0
    %195 = vmatprep.subr.mxu0 0.0
    %196 = vmatpush1.msra.mxu0 0.0
    %197 = vmatprep.subr.mxu0 0.0
    %198 = vmatpush1.msra.mxu0 0.0
    %199 = vmatprep.subr.mxu0 0.0
    %200 = vmatpush1.msra.mxu0 0.0
    %201 = vmatprep.subr.mxu0 0.0
    %202 = vmatpush1.msra.mxu0 0.0
    %203 = vmatprep.subr.mxu0 0.0
    %204 = vmatpush1.msra.mxu0 0.0
    %205 = vmatprep.subr.mxu0 %v177
    %206 = vmatpush1.msra.mxu0 %v174
    %207 = vmatprep.subr.mxu0 %v155
    %208 = vmatpush1.msra.mxu0 %v154
    %209 = vmatprep.subr.mxu0 %v153
    %210 = vmatpush1.msra.mxu0 %v152
    %211 = vmatprep.subr.mxu0 0.0
    %212 = vmatpush2.msra.mxu0 0.0
    %213 = vmatprep.subr.mxu0 0.0
    %214 = vmatpush2.msra.mxu0 0.0
    %215 = vmatprep.subr.mxu0 0.0
    %216 = vmatpush2.msra.mxu0 0.0
    %217 = vmatprep.subr.mxu0 0.0
    %218 = vmatpush2.msra.mxu0 0.0
    %219 = vmatprep.subr.mxu0 0.0
    %220 = vmatpush2.msra.mxu0 0.0
    %221 = vmatprep.subr.mxu0 0.0
    %222 = vmatpush2.msra.mxu0 0.0
    %223 = vmatprep.subr.mxu0 0.0
    %224 = vmatpush2.msra.mxu0 0.0
    %225 = vmatprep.subr.mxu0 0.0
    %226 = vmatpush2.msra.mxu0 0.0
    %227 = vmatprep.subr.mxu0 0.0
    %228 = vmatpush2.msra.mxu0 0.0
    %229 = vmatprep.subr.mxu0 0.0
    %230 = vmatpush2.msra.mxu0 0.0
    %231 = vmatprep.subr.mxu0 0.0
    %232 = vmatpush2.msra.mxu0 0.0
    %233 = vmatprep.subr.mxu0 0.0
    %234 = vmatpush2.msra.mxu0 0.0
    %235 = vmatprep.subr.mxu0 0.0
    %236 = vmatpush2.msra.mxu0 0.0
    %237 = vmatprep.subr.mxu0 0.0
    %238 = vmatpush2.msra.mxu0 0.0
    %239 = vmatprep.subr.mxu0 0.0
    %240 = vmatpush2.msra.mxu0 0.0
    %241 = vmatprep.subr.mxu0 0.0
    %242 = vmatpush2.msra.mxu0 0.0
    %243 = vmatprep.mubr.f32.mxu0 0.0
    %244 = vmatmul.mubr.f32.gmra.mxu0 %v171
    %v245 = vpop.f32.mrf.mxu0
    %v246 = vadd.f32 %v167, %v245
    %v247 = vpop.f32.mrf.mxu0
    %v248 = vadd.f32 %v167, %v247
    %249 = vdwg.mxu0
    %v250 = vmul.f32 %v246, 0.5
    %v251 = vmul.f32 %v248, 0.5
    %v252 = vtanh.pop %v250
    %v253 = vtanh.pop %v251
    %v254 = vadd.f32 %v252, 1.0
    %v255 = vadd.f32 %v253, 1.0
    %v256 = vmul.f32 %v254, 0.5
    %v257 = vmul.f32 %v255, 0.5
    %v260 = vcombine.low %v256, %v257
    %v262 = vunpack.c.l.s4 1966171168
    %v263 = vunpack.c.0.s8 %v262
    %v264 = vlaneseq
    %v265 = vshrl.u32 %v264, 7
    %v266 = vsub.s32 %v263, %v265
    %v267 = vrot.slane %v260, %v266
    %v269 = vunpack.c.l.s4 1966171168
    %v270 = vunpack.c.0.s8 %v269
    %v271 = vlaneseq
    %v272 = vshrl.u32 %v271, 7
    %v273 = vsub.s32 %v270, %v272
    %v274 = vrot.slane %v267, %v273
    %v276 = vlaneseq
    %vm277 = vcmp.ge.s32.totalorder %v276, 0
    %vm278 = vcmp.lt.s32.totalorder %v276, 256
    %vm279 = vmand %vm277, %vm278
    %280 = vst.msk [vmem:[#allocation2] sm:$0x3] %vm279, %v274
    // Predicated region
    $region10: #{tpu_custom_call.1} parent=1 // pred_check
      _
    $region11: #{tpu_custom_call.1} parent=1 // pred_check_branch
      %282 = sbr.rel (0) target = $region13
    $region12: #{tpu_custom_call.1} parent=1 // pred_region
      %s284 = ssub.s32 32, 32
      %285 = vsyncadd [#allocation3], %s284
      %s287 = sshll.u32 [#allocation2], 4
      %s288 = int_to_ptr.vmem [resolvable:$true] %s287
      %290 = dma.vmem_to_hbm [thread:$0]  %s288, 32, %s2, [#allocation3]
    $region13: #{tpu_custom_call.1} parent=1 // pred_fallthru
      _
    // Predicated region
    $region14: #{tpu_custom_call.1} parent=1 // pred_check
      _
    $region15: #{tpu_custom_call.1} parent=1 // pred_check_branch
      %292 = sbr.rel (0) target = $region17
    $region16: #{tpu_custom_call.1} parent=1 // pred_region
      %293 = dma.done [#allocation3], 32
    $region17: #{tpu_custom_call.1} parent=1 // pred_fallthru
      _
    %294 = vsyncpa [#allocation3], 1

</llo_original>
